<compile_context>
chip_gen: v7x
topology: tpu7x:2x2x1
jax: 0.10.0
libtpu: 0.0.40
codegen_flags: <defaults>
</compile_context>

<pallas_src>
import functools

import jax
import jax.numpy as jnp
from jax.experimental import pallas as pl
from jax.experimental.pallas import tpu as pltpu


def _pose_loss_kernel(x_ref, out_ref, *,
                      c1_xyz, c1_q, c2_xyz, c2_q, c3_xyz, c3_q):
    """x_ref: (2, B, 21) VMEM slab.  x_ref[0] = packed predictions,
    x_ref[1] = tiled pre-normalized GT ([xyz, q] x 3), lane-for-lane aligned.
    out_ref: (1, 1) SMEM scalar loss.

    c*_xyz / c*_q are Python-float compile-time scalars folding the branch
    weights, wpqr weights and the 1/(B*D) mean divisors per lane segment.
    """
    pred = x_ref[0]                     # (B, 21) f32
    gt = x_ref[1]                       # (B, 21) f32, quat already normalized
    diff = pred - gt                    # (B, 21)

    # Per-lane weight vector built from iota + scalar literals (no captured
    # array constants, no extra DMA).  Lane layout:
    #   0:3   p1_xyz   3:7   p1_wpqr
    #   7:10  p2_xyz   10:14 p2_wpqr
    #   14:17 p3_xyz   17:21 p3_wpqr
    lane = jax.lax.broadcasted_iota(jnp.int32, (1, 21), 1)
    lane_w = jnp.where(
        lane < 3, c1_xyz,
        jnp.where(lane < 7, c1_q,
                  jnp.where(lane < 10, c2_xyz,
                            jnp.where(lane < 14, c2_q,
                                      jnp.where(lane < 17, c3_xyz, c3_q)))))
    lane_w = lane_w.astype(jnp.float32)

    out_ref[0, 0] = jnp.sum(diff * diff * lane_w)


def pose_loss(p1_xyz, p1_wpqr, p2_xyz, p2_wpqr, p3_xyz, p3_wpqr, poseGT, *,
              w1_xyz, w2_xyz, w3_xyz, w1_wpqr, w2_wpqr, w3_wpqr):
    B = poseGT.shape[0]
    f32 = jnp.float32

    # --- host-side layout plumbing (fuses into one XLA op, one DMA) ---------
    # Packed lane-aligned predictions: (B, 21).
    preds = jnp.concatenate(
        [p1_xyz, p1_wpqr, p2_xyz, p2_wpqr, p3_xyz, p3_wpqr], axis=1).astype(f32)

    # GT with the quaternion L2-normalized exactly like F.normalize(p=2,
    # eps=1e-12): q / max(||q||, 1e-12).  Done here so the kernel is a pure
    # weighted squared difference.
    gt = poseGT.astype(f32)
    q = gt[:, 3:7]
    q_norm = jnp.maximum(jnp.linalg.norm(q, axis=1, keepdims=True), f32(1e-12))
    gt = jnp.concatenate([gt[:, 0:3], q / q_norm], axis=1)        # (B, 7)
    gt_tiled = jnp.tile(gt, (1, 3))                                # (B, 21)

    # Single stacked slab -> one HBM->VMEM DMA.
    x = jnp.stack([preds, gt_tiled], axis=0)                       # (2, B, 21)

    # --- compile-time per-segment scalar weights ----------------------------
    # MSE over (B, 3) -> divide by 3B; over (B, 4) -> divide by 4B.
    kernel = functools.partial(
        _pose_loss_kernel,
        c1_xyz=float(w1_xyz) / (B * 3.0),
        c1_q=float(w1_xyz) * float(w1_wpqr) / (B * 4.0),
        c2_xyz=float(w2_xyz) / (B * 3.0),
        c2_q=float(w2_xyz) * float(w2_wpqr) / (B * 4.0),
        c3_xyz=float(w3_xyz) / (B * 3.0),
        c3_q=float(w3_xyz) * float(w3_wpqr) / (B * 4.0),
    )

    out = pl.pallas_call(
        kernel,
        out_shape=jax.ShapeDtypeStruct((1, 1), jnp.float32),
        in_specs=[pl.BlockSpec(memory_space=pltpu.MemorySpace.VMEM)],
        out_specs=pl.BlockSpec(memory_space=pltpu.MemorySpace.SMEM),
        cost_estimate=pl.CostEstimate(
            flops=4 * B * 21,
            transcendentals=0,
            bytes_accessed=2 * B * 21 * 4 + 4),
    )(x)
    return out[0, 0]


def pose_loss_ref(p1_xyz, p1_wpqr, p2_xyz, p2_wpqr, p3_xyz, p3_wpqr, poseGT, *,
                  w1_xyz, w2_xyz, w3_xyz, w1_wpqr, w2_wpqr, w3_wpqr):
    pose_xyz = poseGT[:, 0:3]
    q = poseGT[:, 3:]
    pose_wpqr = q / jnp.maximum(
        jnp.linalg.norm(q, axis=1, keepdims=True), 1e-12)
    mse = lambda a, b: jnp.mean((a - b) ** 2)
    l1 = mse(p1_xyz, pose_xyz) + mse(p1_wpqr, pose_wpqr) * w1_wpqr
    l2 = mse(p2_xyz, pose_xyz) + mse(p2_wpqr, pose_wpqr) * w2_wpqr
    l3 = mse(p3_xyz, pose_xyz) + mse(p3_wpqr, pose_wpqr) * w3_wpqr
    return w1_xyz * l1 + w2_xyz * l2 + w3_xyz * l3


if __name__ == "__main__":
    # Deterministic "module parameters" (the 6 loss weights from __init__).
    weights = dict(w1_xyz=0.3, w2_xyz=0.3, w3_xyz=1.0,
                   w1_wpqr=150.0, w2_wpqr=150.0, w3_wpqr=500.0)

    B = 2
    key = jax.random.PRNGKey(0)
    k = jax.random.split(key, 7)
    p1_xyz = jax.random.normal(k[0], (B, 3), jnp.float32)
    p1_wpqr = jax.random.normal(k[1], (B, 4), jnp.float32)
    p2_xyz = jax.random.normal(k[2], (B, 3), jnp.float32)
    p2_wpqr = jax.random.normal(k[3], (B, 4), jnp.float32)
    p3_xyz = jax.random.normal(k[4], (B, 3), jnp.float32)
    p3_wpqr = jax.random.normal(k[5], (B, 4), jnp.float32)
    poseGT = jax.random.normal(k[6], (B, 7), jnp.float32)

    loss = pose_loss(p1_xyz, p1_wpqr, p2_xyz, p2_wpqr, p3_xyz, p3_wpqr,
                     poseGT, **weights)
    loss = jax.block_until_ready(loss)

    ref = pose_loss_ref(p1_xyz, p1_wpqr, p2_xyz, p2_wpqr, p3_xyz, p3_wpqr,
                        poseGT, **weights)
    assert jnp.allclose(loss, ref, rtol=1e-5, atol=1e-5), (loss, ref)
    print("KERNEL_OK")
</pallas_src>

<mosaic_0001>
module attributes {stable_mosaic.version = 11 : i64} {
  func.func @_pose_loss_kernel(%arg0: memref<2x2x21xf32, #tpu.memory_space<vmem>>, %arg1: memref<1x1xf32, #tpu.memory_space<smem>>) attributes {dimension_semantics = [], scalar_prefetch = 0 : i64, scratch_operands = 0 : i64, tpu.core_type = #tpu.core_type<tc>} {
    %c0 = arith.constant 0 : index
    %c0_0 = arith.constant 0 : index
    %c0_1 = arith.constant 0 : index
    %0 = vector.load %arg0[%c0, %c0_0, %c0_1] : memref<2x2x21xf32, #tpu.memory_space<vmem>>, vector<1x2x21xf32>
    %1 = vector.shape_cast %0 : vector<1x2x21xf32> to vector<2x21xf32>
    %c1 = arith.constant 1 : index
    %c0_2 = arith.constant 0 : index
    %c0_3 = arith.constant 0 : index
    %2 = vector.load %arg0[%c1, %c0_2, %c0_3] : memref<2x2x21xf32, #tpu.memory_space<vmem>>, vector<1x2x21xf32>
    %3 = vector.shape_cast %2 : vector<1x2x21xf32> to vector<2x21xf32>
    %4 = arith.subf %1, %3 : vector<2x21xf32>
    %5 = tpu.iota {dimensions = array<i32: 1>} : vector<1x21xi32>
    %c3_i32 = arith.constant 3 : i32
    %6 = vector.broadcast %c3_i32 : i32 to vector<1x21xi32>
    %7 = arith.cmpi slt, %5, %6 : vector<1x21xi32>
    %c7_i32 = arith.constant 7 : i32
    %8 = vector.broadcast %c7_i32 : i32 to vector<1x21xi32>
    %9 = arith.cmpi slt, %5, %8 : vector<1x21xi32>
    %c10_i32 = arith.constant 10 : i32
    %10 = vector.broadcast %c10_i32 : i32 to vector<1x21xi32>
    %11 = arith.cmpi slt, %5, %10 : vector<1x21xi32>
    %c14_i32 = arith.constant 14 : i32
    %12 = vector.broadcast %c14_i32 : i32 to vector<1x21xi32>
    %13 = arith.cmpi slt, %5, %12 : vector<1x21xi32>
    %c17_i32 = arith.constant 17 : i32
    %14 = vector.broadcast %c17_i32 : i32 to vector<1x21xi32>
    %15 = arith.cmpi slt, %5, %14 : vector<1x21xi32>
    %cst = arith.constant 0.166666672 : f32
    %cst_4 = arith.constant 6.250000e+01 : f32
    %16 = vector.broadcast %cst : f32 to vector<1x21xf32>
    %17 = vector.broadcast %cst_4 : f32 to vector<1x21xf32>
    %18 = arith.select %15, %16, %17 : vector<1x21xi1>, vector<1x21xf32>
    %cst_5 = arith.constant 5.625000e+00 : f32
    %19 = vector.broadcast %cst_5 : f32 to vector<1x21xf32>
    %20 = arith.select %13, %19, %18 : vector<1x21xi1>, vector<1x21xf32>
    %cst_6 = arith.constant 5.000000e-02 : f32
    %21 = vector.broadcast %cst_6 : f32 to vector<1x21xf32>
    %22 = arith.select %11, %21, %20 : vector<1x21xi1>, vector<1x21xf32>
    %cst_7 = arith.constant 5.625000e+00 : f32
    %23 = vector.broadcast %cst_7 : f32 to vector<1x21xf32>
    %24 = arith.select %9, %23, %22 : vector<1x21xi1>, vector<1x21xf32>
    %cst_8 = arith.constant 5.000000e-02 : f32
    %25 = vector.broadcast %cst_8 : f32 to vector<1x21xf32>
    %26 = arith.select %7, %25, %24 : vector<1x21xi1>, vector<1x21xf32>
    %27 = arith.mulf %4, %4 : vector<2x21xf32>
    %28 = vector.broadcast %26 : vector<1x21xf32> to vector<2x21xf32>
    %29 = arith.mulf %27, %28 : vector<2x21xf32>
    %30 = vector.shape_cast %29 : vector<2x21xf32> to vector<1x2x21xf32>
    %cst_9 = arith.constant dense<0.000000e+00> : vector<1xf32>
    %31 = vector.multi_reduction <add>, %30, %cst_9 [1, 2] : vector<1x2x21xf32> to vector<1xf32>
    %32 = vector.shape_cast %31 : vector<1xf32> to vector<1x1x1xf32>
    %33 = vector.extract %32[0, 0, 0] : f32 from vector<1x1x1xf32>
    %c0_10 = arith.constant 0 : index
    %c0_11 = arith.constant 0 : index
    %34 = memref.load %arg1[%c0_10, %c0_11] : memref<1x1xf32, #tpu.memory_space<smem>>
    memref.store %33, %arg1[%c0_10, %c0_11] : memref<1x1xf32, #tpu.memory_space<smem>>
    return
  }
}

</mosaic_0001>

<llo_original>
// kernel: tpu_custom_call.1
$region0: #{tpu_custom_call.1}
  #allocation0 [shape = 'u32[]', space=smem, size = 0x4, offset = 0x4, fixed_abs, tag = 'smem constant byte address 0x4 - core index']
  #allocation1 [shape = 'u32[144,128]{1,0:T(1,128)}', space=vmem, size = 0x12000, scoped, tag = 'internal scratch']
  %s0 = inlined_call_operand.hbm [shape: f32[2,2,21], index: 0, kind: input, shape index: {}]
  %s1 = inlined_call_operand.hbm [shape: f32[1,1], index: 1, kind: output, shape index: {}]
  %s2 = sld [smem:[#allocation0]]
  $region18: #{tpu_custom_call.1} parent=0
    _
  %s4 = ssub.s32 1, %s2
  %s5 = scalar_select 0, %s4, %s2
  $region1: #{tpu_custom_call.1} parent=0
    #allocation2 [shape = 'u8[2048]{0}', space=vmem, size = 0x800, scoped, tag = 'input window, operand 0, single buffered']
    #allocation3 [shape = 's32[1]{0}', space=sflag, size = 0x4, scoped, tag = 'scoped memory for tpu_custom_call.1']
    #allocation4 [shape = 's32[1]{0}', space=sflag, size = 0x4, scoped, tag = 'scoped memory for tpu_custom_call.1']
    #allocation5 [shape = 'u8[512]{0}', space=smem, size = 0x200, scoped, tag = 'output window, operand 0, single buffered']
    %6 = vsyncpa [#allocation3], 0
    %7 = vsyncpa [#allocation4], 0
    // Predicated region
    $region2: #{tpu_custom_call.1} parent=1 // pred_check
      _
    $region3: #{tpu_custom_call.1} parent=1 // pred_check_branch
      %9 = sbr.rel (0) target = $region5
    $region4: #{tpu_custom_call.1} parent=1 // pred_region
      %s11 = ssub.s32 64, 64
      %12 = vsyncadd [#allocation3], %s11
      %s13 = sshll.u32 [#allocation2], 4
      %s14 = int_to_ptr.vmem [resolvable:$true] %s13
      %19 = dma.hbm_to_vmem [thread:$0]  %s0, 64, %s14, [#allocation3], 32, 32, 2
    $region5: #{tpu_custom_call.1} parent=1 // pred_fallthru
      _
    // Predicated region
    $region6: #{tpu_custom_call.1} parent=1 // pred_check
      _
    $region7: #{tpu_custom_call.1} parent=1 // pred_check_branch
      %21 = sbr.rel (0) target = $region9
    $region8: #{tpu_custom_call.1} parent=1 // pred_region
      %22 = dma.done [#allocation3], 64
    $region9: #{tpu_custom_call.1} parent=1 // pred_fallthru
      _
    %v23 = vld [vmem:[#allocation2] sm:$0x3]
    %s24 = scalar_lea.vmem [#allocation2], 2
    %v25 = vld [vmem:[%s24] sm:$0x3]
    %v26 = vsub.f32 %v23, %v25
    %v27 = vlaneseq
    %v28 = vand.u32 %v27, 127
    %vm29 = vcmp.lt.s32.totalorder %v28, 3
    %vm30 = vcmp.lt.s32.totalorder %v28, 7
    %vm31 = vcmp.lt.s32.totalorder %v28, 10
    %vm32 = vcmp.lt.s32.totalorder %v28, 14
    %vm33 = vcmp.lt.s32.totalorder %v28, 17
    %v34 = vsel %vm33, 0.16666667, 62.5
    %v35 = vsel %vm32, 5.625, %v34
    %v36 = vsel %vm31, 0.05, %v35
    %v37 = vsel %vm30, 5.625, %v36
    %v38 = vsel %vm29, 0.05, %v37
    %v39 = vmul.f32 %v26, %v26
    %v40 = vmul.f32 %v39, %v38
    %vm41 = vcmask 164864
    %v42 = vsel %vm41, %v40, 0.0
    %43 = vadd.xlane.f32.xlu0 %v42
    %v44 = vpop.xlane.xlu0 %43
    %v45 = vrot.slane %v44, 4
    %v46 = vadd.f32 %v44, %v45
    %v47 = vrot.slane %v46, 2
    %v48 = vadd.f32 %v46, %v47
    %v49 = vrot.slane %v48, 1
    %v50 = vadd.f32 %v48, %v49
    %s51 = vtos %v50
    %s52 = scalar_lea.smem [#allocation5], 0
    %53 = sst [smem:[%s52]] %s51
    // Predicated region
    $region10: #{tpu_custom_call.1} parent=1 // pred_check
      _
    $region11: #{tpu_custom_call.1} parent=1 // pred_check_branch
      %55 = sbr.rel (0) target = $region13
    $region12: #{tpu_custom_call.1} parent=1 // pred_region
      %s57 = ssub.s32 16, 16
      %58 = vsyncadd [#allocation4], %s57
      %61 = dma.smem_to_hbm [#allocation5], 16, %s1, [#allocation4]
    $region13: #{tpu_custom_call.1} parent=1 // pred_fallthru
      _
    // Predicated region
    $region14: #{tpu_custom_call.1} parent=1 // pred_check
      _
    $region15: #{tpu_custom_call.1} parent=1 // pred_check_branch
      %63 = sbr.rel (0) target = $region17
    $region16: #{tpu_custom_call.1} parent=1 // pred_region
      %64 = dma.done [#allocation4], 16
    $region17: #{tpu_custom_call.1} parent=1 // pred_fallthru
      _
    %65 = sfence
    %66 = vsyncpa [#allocation3], 1
    %67 = vsyncpa [#allocation4], 1

</llo_original>
